<compile_context>
chip_gen: v7x
topology: tpu7x:2x2x1
jax: 0.10.0
libtpu: 0.0.40
codegen_flags: <defaults>
</compile_context>

<pallas_src>
import functools

import jax
import jax.numpy as jnp
import numpy as np
from jax import lax
from jax.experimental import pallas as pl
from jax.experimental.pallas import tpu as pltpu

_TILE_BYTE_BUDGET = 2 * 1024 * 1024    # VMEM footprint per stream per block
_VMEM_LIMIT_BYTES = 48 * 1024 * 1024   # safe on v5e/v6e (128 MiB phys) and v7x (64 MiB)


def _round_up(x, m):
    return ((x + m - 1) // m) * m


@functools.lru_cache(maxsize=1)
def _num_tensorcores():
    """2 TensorCores per chip on v4 / v5p / v7x; 1 on v5e / v6e (gates the core split)."""
    try:
        kind = jax.devices()[0].device_kind.lower()
    except Exception:
        return 1
    return 2 if any(tag in kind for tag in ("v4", "v5p", "v7", "7x")) else 1


def _flat_lane_width(total, n_cols):
    """Largest lane width (multiple of 128) that exactly tiles the flattened array."""
    if n_cols % 128 == 0:
        return None                      # already lane-aligned; keep native layout
    for w in (1024, 512, 256, 128):
        if total % w == 0:
            return w
    return None


def _pick_row_tile(n_rows, n_cols):
    """Rows per block, budgeted by VMEM footprint (lanes pad to 128 in VMEM)."""
    lane_cols = _round_up(n_cols, 128)
    budget_rows = max(32, (_TILE_BYTE_BUDGET // (4 * lane_cols)) // 32 * 32)
    # Prefer >= 2 blocks so a 2-TensorCore chip (v7x) keeps both cores streaming.
    half = _round_up(pl.cdiv(n_rows, 2), 32)
    tb = min(budget_rows, max(32, half))
    if tb >= n_rows:
        return n_rows                    # single full-extent block (exempt from (8,128) rule)
    return tb                            # multiple of 32: safe for f32 / bf16 / int8 sublanes


def _focal_elem(p, t, alpha, gamma):
    """Elementwise sigmoid focal loss in f32 (mirrors the PyTorch formula).

    One exp + one log per element: e = exp(-|p|) feeds both the sigmoid (via one
    exact reciprocal) and the numerically stable BCE-with-logits term.
    """
    e = jnp.exp(-jnp.abs(p))
    inv = 1.0 / (1.0 + e)                       # exact (approx recip would hurt tolerance)
    sig = jnp.where(p >= 0.0, inv, e * inv)     # == sigmoid(p)
    pt = sig * t + (1.0 - sig) * (1.0 - t)
    at = alpha * t + (1.0 - alpha) * (1.0 - t)
    omp = 1.0 - pt
    if float(gamma) == 2.0:
        focal_w = at * omp * omp                # default path avoids pow
    else:
        focal_w = at * jnp.power(omp, gamma)
    bce = jnp.maximum(p, 0.0) - p * t + jnp.log(1.0 + e)
    return focal_w * bce


# ------------------------- elementwise (reduction='none') -------------------------

def _elem_kernel(p_ref, t_ref, o_ref, *, alpha, gamma):
    p = p_ref[...].astype(jnp.float32)
    t = t_ref[...].astype(jnp.float32)
    o_ref[...] = _focal_elem(p, t, alpha, gamma).astype(o_ref.dtype)


def _elem_w_kernel(p_ref, t_ref, w_ref, o_ref, *, alpha, gamma):
    p = p_ref[...].astype(jnp.float32)
    t = t_ref[...].astype(jnp.float32)
    loss = _focal_elem(p, t, alpha, gamma) * w_ref[...].astype(jnp.float32)
    o_ref[...] = loss.astype(o_ref.dtype)


# ------------------------- global-sum (avg_factor) path -------------------------
# Output block (1, 1, W) is the resident f32 accumulator per core split; grid =
# (n_split "parallel", n_inner "arbitrary"). Padded / duplicated rows are masked
# with a select, but only on blocks that can actually contain invalid rows.

def _accum_rowsum(o_ref, loss, row0, row_tile, n_valid):
    def _add(x):
        o_ref[...] += jnp.sum(x, axis=0, keepdims=True)[None, :, :]

    is_full = row0 + row_tile <= n_valid

    @pl.when(is_full)
    def _():
        _add(loss)

    @pl.when(jnp.logical_not(is_full))
    def _():
        rows = row0 + lax.broadcasted_iota(jnp.int32, (row_tile, 1), 0)
        # select (not multiply): garbage / NaN in out-of-range rows cannot leak in.
        _add(jnp.where(rows < n_valid, loss, 0.0))


def _sum_kernel(p_ref, t_ref, o_ref, *, alpha, gamma, n_valid, row_tile):
    @pl.when(pl.program_id(1) == 0)
    def _():
        o_ref[...] = jnp.zeros_like(o_ref)

    loss = _focal_elem(p_ref[...].astype(jnp.float32),
                       t_ref[...].astype(jnp.float32), alpha, gamma)
    row0 = (pl.program_id(0) * pl.num_programs(1) + pl.program_id(1)) * row_tile
    _accum_rowsum(o_ref, loss, row0, row_tile, n_valid)


def _sum_w_kernel(p_ref, t_ref, w_ref, o_ref, *, alpha, gamma, n_valid, row_tile):
    @pl.when(pl.program_id(1) == 0)
    def _():
        o_ref[...] = jnp.zeros_like(o_ref)

    loss = _focal_elem(p_ref[...].astype(jnp.float32),
                       t_ref[...].astype(jnp.float32), alpha, gamma)
    loss = loss * w_ref[...].astype(jnp.float32)
    row0 = (pl.program_id(0) * pl.num_programs(1) + pl.program_id(1)) * row_tile
    _accum_rowsum(o_ref, loss, row0, row_tile, n_valid)


@functools.partial(
    jax.jit,
    static_argnames=("alpha", "gamma", "has_weight", "has_avg_factor", "n_tc"))
def _focal_impl(pred, target, weight, avg_factor, alpha, gamma,
                has_weight, has_avg_factor, n_tc):
    b, c = pred.shape
    n_elem = b * c
    itemsize = pred.dtype.itemsize
    out_dtype = pred.dtype

    # Lane-dense layout for the no-weight paths (per-row weight broadcast keeps (B,C)).
    w_lane = None if has_weight else _flat_lane_width(n_elem, c)
    if w_lane is not None:
        rows, cols = n_elem // w_lane, w_lane
        p2 = pred.reshape(rows, cols)
        t2 = target.reshape(rows, cols)
    else:
        rows, cols = b, c
        p2, t2 = pred, target

    tb = _pick_row_tile(rows, cols)
    n_blocks = pl.cdiv(rows, tb)
    w_bytes = 4 * b if has_weight else 0

    if has_avg_factor:
        # --- reduction path -> scalar ---
        n_split = 2 if (n_tc >= 2 and n_blocks >= 2) else 1
        n_inner = pl.cdiv(n_blocks, n_split)
        last_blk = n_blocks - 1

        def in_map(ci, i):
            # Clamp duplicated out-of-range blocks (odd block count with the 2-way
            # split); their logical rows fall outside [0, rows) and are masked to 0.
            return (jnp.minimum(ci * n_inner + i, last_blk), 0)

        in_specs = [pl.BlockSpec((tb, cols), in_map),
                    pl.BlockSpec((tb, cols), in_map)]
        args = [p2, t2]
        if has_weight:
            in_specs.append(pl.BlockSpec((tb, 1), in_map))
            args.append(weight)
            kernel = functools.partial(_sum_w_kernel, alpha=float(alpha),
                                       gamma=float(gamma), n_valid=rows, row_tile=tb)
        else:
            kernel = functools.partial(_sum_kernel, alpha=float(alpha),
                                       gamma=float(gamma), n_valid=rows, row_tile=tb)

        cost = pl.CostEstimate(flops=22 * n_elem, transcendentals=2 * n_elem,
                               bytes_accessed=2 * n_elem * itemsize + w_bytes)

        partials = pl.pallas_call(
            kernel,
            out_shape=jax.ShapeDtypeStruct((n_split, 1, cols), jnp.float32),
            grid_spec=pltpu.PrefetchScalarGridSpec(
                num_scalar_prefetch=0,
                grid=(n_split, n_inner),
                in_specs=in_specs,
                out_specs=pl.BlockSpec((1, 1, cols), lambda ci, i: (ci, 0, 0)),
            ),
            compiler_params=pltpu.CompilerParams(
                dimension_semantics=("parallel", "arbitrary"),
                vmem_limit_bytes=_VMEM_LIMIT_BYTES),
            cost_estimate=cost,
        )(*args)

        total = jnp.sum(partials)
        return (total / (avg_factor.astype(jnp.float32) + 1e-6)).astype(out_dtype)

    # --- elementwise path -> (B, C) loss tensor ---
    tile = pl.BlockSpec((tb, cols), lambda i: (i, 0))
    in_specs = [tile, tile]
    args = [p2, t2]
    if has_weight:
        in_specs.append(pl.BlockSpec((tb, 1), lambda i: (i, 0)))
        args.append(weight)
        kernel = functools.partial(_elem_w_kernel, alpha=float(alpha), gamma=float(gamma))
    else:
        kernel = functools.partial(_elem_kernel, alpha=float(alpha), gamma=float(gamma))

    cost = pl.CostEstimate(flops=20 * n_elem, transcendentals=2 * n_elem,
                           bytes_accessed=3 * n_elem * itemsize + w_bytes)

    out = pl.pallas_call(
        kernel,
        out_shape=jax.ShapeDtypeStruct((rows, cols), out_dtype),
        grid_spec=pltpu.PrefetchScalarGridSpec(
            num_scalar_prefetch=0,
            grid=(n_blocks,),
            in_specs=in_specs,
            out_specs=tile,
        ),
        compiler_params=pltpu.CompilerParams(
            dimension_semantics=("parallel",),
            vmem_limit_bytes=_VMEM_LIMIT_BYTES),
        cost_estimate=cost,
    )(*args)
    return out if w_lane is None else out.reshape(b, c)


def sigmoid_focal_loss(pred, target, weight=None, avg_factor=None,
                       alpha=0.25, gamma=2.0):
    """Matches SigmoidFocalLoss.forward semantics."""
    pred = jnp.asarray(pred)
    target = jnp.asarray(target)
    if target.ndim == 1:
        # integer class labels -> one-hot (cheap wrapper glue, kept out of the kernel)
        target = jax.nn.one_hot(target, pred.shape[1], dtype=pred.dtype)
    has_weight = weight is not None
    has_avg_factor = avg_factor is not None
    if has_weight:
        w = jnp.asarray(weight).reshape(-1, 1).astype(jnp.float32)  # .view(-1,1).float()
    else:
        w = jnp.zeros((1, 1), jnp.float32)  # unused placeholder
    af = (jnp.asarray(avg_factor, jnp.float32) if has_avg_factor
          else jnp.zeros((), jnp.float32))
    return _focal_impl(pred, target, w, af, float(alpha), float(gamma),
                       has_weight, has_avg_factor, _num_tensorcores())


class SigmoidFocalLoss:
    """JAX/Pallas port of the PyTorch SigmoidFocalLoss module (forward only)."""

    def __init__(self, alpha=0.25, gamma=2.0):
        self.alpha = float(alpha)
        self.gamma = float(gamma)

    def __call__(self, pred, target, weight=None, avg_factor=None):
        return sigmoid_focal_loss(pred, target, weight=weight, avg_factor=avg_factor,
                                  alpha=self.alpha, gamma=self.gamma)


def _reference(pred, target, weight=None, avg_factor=None, alpha=0.25, gamma=2.0):
    """Pure-JAX transcription of the PyTorch module's math."""
    p = pred.astype(jnp.float32)
    t = target.astype(jnp.float32)
    sig = 1.0 / (1.0 + jnp.exp(-p))
    pt = sig * t + (1.0 - sig) * (1.0 - t)
    at = alpha * t + (1.0 - alpha) * (1.0 - t)
    w_focal = at * (1.0 - pt) ** gamma
    bce = jnp.maximum(p, 0.0) - p * t + jnp.log(1.0 + jnp.exp(-jnp.abs(p)))
    loss = w_focal * bce
    if weight is not None:
        loss = loss * jnp.asarray(weight).reshape(-1, 1).astype(jnp.float32)
    if avg_factor is not None:
        loss = loss.sum() / (avg_factor + 1e-6)
    return loss


if __name__ == "__main__":
    key = jax.random.PRNGKey(0)
    k1, k2, k3, k4, k5 = jax.random.split(key, 5)

    loss_mod = SigmoidFocalLoss(alpha=0.25, gamma=2.0)

    # Case 1: lane-dense flattened elementwise path (B*C divisible by 1024).
    B1, C1 = 256, 16
    pred1 = jax.random.normal(k1, (B1, C1), jnp.float32) * 2.0
    lab1 = jax.random.randint(k2, (B1,), 0, C1)
    tgt1 = jax.nn.one_hot(lab1, C1, dtype=jnp.float32)
    out1 = jax.block_until_ready(loss_mod(pred1, tgt1))
    assert out1.shape == (B1, C1)
    np.testing.assert_allclose(np.asarray(out1), np.asarray(_reference(pred1, tgt1)),
                               rtol=1e-5, atol=1e-5)

    # Case 2: (B, C) fallback path with a ragged last tile + integer labels.
    B2, C2 = 200, 20
    pred2 = jax.random.normal(k3, (B2, C2), jnp.float32) * 2.0
    lab2 = jax.random.randint(k4, (B2,), 0, C2)
    tgt2 = jax.nn.one_hot(lab2, C2, dtype=jnp.float32)
    wt2 = jax.random.uniform(k5, (B2,), jnp.float32)
    out2 = jax.block_until_ready(loss_mod(pred2, lab2))
    assert out2.shape == (B2, C2)
    np.testing.assert_allclose(np.asarray(out2), np.asarray(_reference(pred2, tgt2)),
                               rtol=1e-5, atol=1e-5)

    # Case 3: per-sample weight (keeps the (B, C) layout for the row broadcast).
    out3 = jax.block_until_ready(loss_mod(pred2, tgt2, weight=wt2))
    np.testing.assert_allclose(np.asarray(out3),
                               np.asarray(_reference(pred2, tgt2, weight=wt2)),
                               rtol=1e-5, atol=1e-5)

    # Case 4: avg_factor reduction, flattened lane-dense layout, multi-block grid.
    B4, C4 = 8192, 16
    pred4 = jax.random.normal(k1, (B4, C4), jnp.float32)
    lab4 = jax.random.randint(k2, (B4,), 0, C4)
    tgt4 = jax.nn.one_hot(lab4, C4, dtype=jnp.float32)
    out4 = jax.block_until_ready(loss_mod(pred4, tgt4, avg_factor=123.0))
    assert out4.shape == ()
    np.testing.assert_allclose(np.asarray(out4),
                               np.asarray(_reference(pred4, tgt4, avg_factor=123.0)),
                               rtol=1e-4, atol=1e-6)

    # Case 5: weight + avg_factor, (B, C) layout, ragged reduction tile (masked rows).
    B5, C5 = 1000, 20
    pred5 = jax.random.normal(k3, (B5, C5), jnp.float32)
    lab5 = jax.random.randint(k4, (B5,), 0, C5)
    tgt5 = jax.nn.one_hot(lab5, C5, dtype=jnp.float32)
    wt5 = jax.random.uniform(k5, (B5,), jnp.float32)
    out5 = jax.block_until_ready(loss_mod(pred5, tgt5, weight=wt5, avg_factor=77.0))
    assert out5.shape == ()
    np.testing.assert_allclose(
        np.asarray(out5),
        np.asarray(_reference(pred5, tgt5, weight=wt5, avg_factor=77.0)),
        rtol=1e-4, atol=1e-6)

    print("KERNEL_OK")
</pallas_src>

<mosaic_0001>
module attributes {stable_mosaic.version = 11 : i64} {
  func.func @_elem_kernel(%arg0: i32, %arg1: memref<4x1024xf32, #tpu.memory_space<vmem>>, %arg2: memref<4x1024xf32, #tpu.memory_space<vmem>>, %arg3: memref<4x1024xf32, #tpu.memory_space<vmem>>) attributes {dimension_semantics = [#tpu.dimension_semantics<parallel>], iteration_bounds = array<i64: 1>, scalar_prefetch = 0 : i64, scratch_operands = 0 : i64, tpu.core_type = #tpu.core_type<tc>, window_params = [{transform_indices = @transform_0, window_bounds = array<i64: 4, 1024>}, {transform_indices = @transform_1, window_bounds = array<i64: 4, 1024>}, {transform_indices = @transform_2, window_bounds = array<i64: 4, 1024>}]} {
    %c0 = arith.constant 0 : index
    %c0_0 = arith.constant 0 : index
    %0 = vector.load %arg1[%c0, %c0_0] : memref<4x1024xf32, #tpu.memory_space<vmem>>, vector<4x1024xf32>
    %c0_1 = arith.constant 0 : index
    %c0_2 = arith.constant 0 : index
    %1 = vector.load %arg2[%c0_1, %c0_2] : memref<4x1024xf32, #tpu.memory_space<vmem>>, vector<4x1024xf32>
    %2 = math.absf %0 : vector<4x1024xf32>
    %cst = arith.constant 0.000000e+00 : f32
    %3 = vector.broadcast %cst : f32 to vector<4x1024xf32>
    %4 = arith.subf %3, %2 : vector<4x1024xf32>
    %5 = math.exp %4 : vector<4x1024xf32>
    %cst_3 = arith.constant 1.000000e+00 : f32
    %6 = vector.broadcast %cst_3 : f32 to vector<4x1024xf32>
    %7 = arith.addf %6, %5 : vector<4x1024xf32>
    %cst_4 = arith.constant 1.000000e+00 : f32
    %8 = vector.broadcast %cst_4 : f32 to vector<4x1024xf32>
    %9 = arith.divf %8, %7 : vector<4x1024xf32>
    %cst_5 = arith.constant 0.000000e+00 : f32
    %10 = vector.broadcast %cst_5 : f32 to vector<4x1024xf32>
    %11 = arith.cmpf oge, %0, %10 : vector<4x1024xf32>
    %12 = arith.mulf %5, %9 : vector<4x1024xf32>
    %13 = arith.select %11, %9, %12 : vector<4x1024xi1>, vector<4x1024xf32>
    %14 = arith.mulf %13, %1 : vector<4x1024xf32>
    %cst_6 = arith.constant 1.000000e+00 : f32
    %15 = vector.broadcast %cst_6 : f32 to vector<4x1024xf32>
    %16 = arith.subf %15, %13 : vector<4x1024xf32>
    %cst_7 = arith.constant 1.000000e+00 : f32
    %17 = vector.broadcast %cst_7 : f32 to vector<4x1024xf32>
    %18 = arith.subf %17, %1 : vector<4x1024xf32>
    %19 = arith.mulf %16, %18 : vector<4x1024xf32>
    %20 = arith.addf %14, %19 : vector<4x1024xf32>
    %cst_8 = arith.constant 2.500000e-01 : f32
    %21 = vector.broadcast %cst_8 : f32 to vector<4x1024xf32>
    %22 = arith.mulf %21, %1 : vector<4x1024xf32>
    %cst_9 = arith.constant 1.000000e+00 : f32
    %23 = vector.broadcast %cst_9 : f32 to vector<4x1024xf32>
    %24 = arith.subf %23, %1 : vector<4x1024xf32>
    %cst_10 = arith.constant 7.500000e-01 : f32
    %25 = vector.broadcast %cst_10 : f32 to vector<4x1024xf32>
    %26 = arith.mulf %25, %24 : vector<4x1024xf32>
    %27 = arith.addf %22, %26 : vector<4x1024xf32>
    %cst_11 = arith.constant 1.000000e+00 : f32
    %28 = vector.broadcast %cst_11 : f32 to vector<4x1024xf32>
    %29 = arith.subf %28, %20 : vector<4x1024xf32>
    %30 = arith.mulf %27, %29 : vector<4x1024xf32>
    %31 = arith.mulf %30, %29 : vector<4x1024xf32>
    %cst_12 = arith.constant 0.000000e+00 : f32
    %32 = vector.broadcast %cst_12 : f32 to vector<4x1024xf32>
    %33 = arith.maximumf %0, %32 : vector<4x1024xf32>
    %34 = arith.mulf %0, %1 : vector<4x1024xf32>
    %35 = arith.subf %33, %34 : vector<4x1024xf32>
    %cst_13 = arith.constant 1.000000e+00 : f32
    %36 = vector.broadcast %cst_13 : f32 to vector<4x1024xf32>
    %37 = arith.addf %36, %5 : vector<4x1024xf32>
    %38 = math.log %37 : vector<4x1024xf32>
    %39 = arith.addf %35, %38 : vector<4x1024xf32>
    %40 = arith.mulf %31, %39 : vector<4x1024xf32>
    %c0_14 = arith.constant 0 : index
    %c0_15 = arith.constant 0 : index
    %41 = vector.load %arg3[%c0_14, %c0_15] : memref<4x1024xf32, #tpu.memory_space<vmem>>, vector<4x1024xf32>
    tpu.vector_store %arg3[%c0_14, %c0_15], %40 {strides = array<i32>} : memref<4x1024xf32, #tpu.memory_space<vmem>>, vector<4x1024xf32>,
    return
  }
  func.func @transform_0(%arg0: i32) -> (i32, i32) {
    %c0_i32 = arith.constant 0 : i32
    %c0_i32_0 = arith.constant 0 : i32
    return %arg0, %c0_i32 : i32, i32
  }
  func.func @transform_1(%arg0: i32) -> (i32, i32) {
    %c0_i32 = arith.constant 0 : i32
    %c0_i32_0 = arith.constant 0 : i32
    return %arg0, %c0_i32 : i32, i32
  }
  func.func @transform_2(%arg0: i32) -> (i32, i32) {
    %c0_i32 = arith.constant 0 : i32
    %c0_i32_0 = arith.constant 0 : i32
    return %arg0, %c0_i32 : i32, i32
  }
}

</mosaic_0001>

<llo_original>
// kernel: _focal_impl.1
$region0: #{_focal_impl.1}
  #allocation0 [shape = 'u32[]', space=smem, size = 0x4, offset = 0x4, fixed_abs, tag = 'smem constant byte address 0x4 - core index']
  #allocation1 [shape = 'u32[144,128]{1,0:T(1,128)}', space=vmem, size = 0x12000, scoped, tag = 'internal scratch']
  %s0 = inlined_call_operand.vmem [shape: f32[4,1024], index: 0, kind: input, shape index: {}]
  %s1 = inlined_call_operand.vmem [shape: f32[4,1024], index: 1, kind: input, shape index: {}]
  %s2 = inlined_call_operand.vmem [shape: f32[4,1024], index: 2, kind: output, shape index: {}]
  %s3 = sld [smem:[#allocation0]]
  $region18: #{_focal_impl.1} parent=0
    _
  %s5 = ssub.s32 1, %s3
  %s6 = scalar_select 0, %s5, %s3
  // Predicated region
  $region2: #{_focal_impl.1} parent=0 // pred_check
    _
  $region3: #{_focal_impl.1} parent=0 // pred_check_branch
    %8 = sbr.rel (0) target = $region5
  $region4: #{_focal_impl.1} parent=0 // pred_region
    _
  $region5: #{_focal_impl.1} parent=0 // pred_fallthru
    _
  // Predicated region
  $region6: #{_focal_impl.1} parent=0 // pred_check
    _
  $region7: #{_focal_impl.1} parent=0 // pred_check_branch
    %10 = sbr.rel (0) target = $region9
  $region8: #{_focal_impl.1} parent=0 // pred_region
    _
  $region9: #{_focal_impl.1} parent=0 // pred_fallthru
    _
  %v11 = vld [vmem:[%s0] sm:$0xff]
  %v12 = vld [vmem:[%s0 + $0x8] sm:$0xff]
  %v13 = vld [vmem:[%s0 + $0x10] sm:$0xff]
  %v14 = vld [vmem:[%s0 + $0x18] sm:$0xff]
  %v15 = vld [vmem:[%s1] sm:$0xff]
  %v16 = vld [vmem:[%s1 + $0x8] sm:$0xff]
  %v17 = vld [vmem:[%s1 + $0x10] sm:$0xff]
  %v18 = vld [vmem:[%s1 + $0x18] sm:$0xff]
  %v19 = vand.u32 2147483647, %v11
  %v20 = vand.u32 2147483647, %v12
  %v21 = vand.u32 2147483647, %v13
  %v22 = vand.u32 2147483647, %v14
  %v23 = vsub.f32 0.0, %v19
  %v24 = vsub.f32 0.0, %v20
  %v25 = vsub.f32 0.0, %v21
  %v26 = vsub.f32 0.0, %v22
  %v27 = vmul.f32 %v23, 1.442695
  %v28 = vpow.pop %v27
  %v29 = vmul.f32 %v24, 1.442695
  %v30 = vpow.pop %v29
  %v31 = vmul.f32 %v25, 1.442695
  %v32 = vpow.pop %v31
  %v33 = vmul.f32 %v26, 1.442695
  %v34 = vpow.pop %v33
  %v35 = vadd.f32 %v28, 1.0
  %v36 = vadd.f32 %v30, 1.0
  %v37 = vadd.f32 %v32, 1.0
  %v38 = vadd.f32 %v34, 1.0
  %v39 = vrcp.pop %v35
  %v40 = vmul.f32 1.0, %v39
  %v41 = vrcp.pop %v36
  %v42 = vmul.f32 1.0, %v41
  %v43 = vrcp.pop %v37
  %v44 = vmul.f32 1.0, %v43
  %v45 = vrcp.pop %v38
  %v46 = vmul.f32 1.0, %v45
  %vm47 = vcmp.ge.f32.partialorder %v11, 0.0
  %vm48 = vcmp.ge.f32.partialorder %v12, 0.0
  %vm49 = vcmp.ge.f32.partialorder %v13, 0.0
  %vm50 = vcmp.ge.f32.partialorder %v14, 0.0
  %v51 = vmul.f32 %v28, %v40
  %v52 = vmul.f32 %v30, %v42
  %v53 = vmul.f32 %v32, %v44
  %v54 = vmul.f32 %v34, %v46
  %v55 = vsel %vm47, %v40, %v51
  %v56 = vsel %vm48, %v42, %v52
  %v57 = vsel %vm49, %v44, %v53
  %v58 = vsel %vm50, %v46, %v54
  %v59 = vmul.f32 %v55, %v15
  %v60 = vmul.f32 %v56, %v16
  %v61 = vmul.f32 %v57, %v17
  %v62 = vmul.f32 %v58, %v18
  %v63 = vsub.f32 1.0, %v55
  %v64 = vsub.f32 1.0, %v56
  %v65 = vsub.f32 1.0, %v57
  %v66 = vsub.f32 1.0, %v58
  %v67 = vsub.f32 1.0, %v15
  %v68 = vsub.f32 1.0, %v16
  %v69 = vsub.f32 1.0, %v17
  %v70 = vsub.f32 1.0, %v18
  %v71 = vmul.f32 %v63, %v67
  %v72 = vmul.f32 %v64, %v68
  %v73 = vmul.f32 %v65, %v69
  %v74 = vmul.f32 %v66, %v70
  %v75 = vadd.f32 %v59, %v71
  %v76 = vadd.f32 %v60, %v72
  %v77 = vadd.f32 %v61, %v73
  %v78 = vadd.f32 %v62, %v74
  %v79 = vmul.f32 %v15, 0.25
  %v80 = vmul.f32 %v16, 0.25
  %v81 = vmul.f32 %v17, 0.25
  %v82 = vmul.f32 %v18, 0.25
  %v83 = vmul.f32 %v67, 0.75
  %v84 = vmul.f32 %v68, 0.75
  %v85 = vmul.f32 %v69, 0.75
  %v86 = vmul.f32 %v70, 0.75
  %v87 = vadd.f32 %v79, %v83
  %v88 = vadd.f32 %v80, %v84
  %v89 = vadd.f32 %v81, %v85
  %v90 = vadd.f32 %v82, %v86
  %v91 = vsub.f32 1.0, %v75
  %v92 = vsub.f32 1.0, %v76
  %v93 = vsub.f32 1.0, %v77
  %v94 = vsub.f32 1.0, %v78
  %v95 = vmul.f32 %v87, %v91
  %v96 = vmul.f32 %v88, %v92
  %v97 = vmul.f32 %v89, %v93
  %v98 = vmul.f32 %v90, %v94
  %v99 = vmul.f32 %v95, %v91
  %v100 = vmul.f32 %v96, %v92
  %v101 = vmul.f32 %v97, %v93
  %v102 = vmul.f32 %v98, %v94
  %v103 = vmax.f32 %v11, 0.0
  %v104 = vmax.f32 %v12, 0.0
  %v105 = vmax.f32 %v13, 0.0
  %v106 = vmax.f32 %v14, 0.0
  %v107 = vmul.f32 %v11, %v15
  %v108 = vmul.f32 %v12, %v16
  %v109 = vmul.f32 %v13, %v17
  %v110 = vmul.f32 %v14, %v18
  %v111 = vsub.f32 %v103, %v107
  %v112 = vsub.f32 %v104, %v108
  %v113 = vsub.f32 %v105, %v109
  %v114 = vsub.f32 %v106, %v110
  %v115 = vlog2.pop %v35
  %v116 = vmul.f32 %v115, 0.6931472
  %v117 = vlog2.pop %v36
  %v118 = vmul.f32 %v117, 0.6931472
  %v119 = vlog2.pop %v37
  %v120 = vmul.f32 %v119, 0.6931472
  %v121 = vlog2.pop %v38
  %v122 = vmul.f32 %v121, 0.6931472
  %v123 = vadd.f32 %v111, %v116
  %v124 = vadd.f32 %v112, %v118
  %v125 = vadd.f32 %v113, %v120
  %v126 = vadd.f32 %v114, %v122
  %v127 = vmul.f32 %v99, %v123
  %v128 = vmul.f32 %v100, %v124
  %v129 = vmul.f32 %v101, %v125
  %v130 = vmul.f32 %v102, %v126
  %131 = vst [vmem:[%s2] sm:$0xff] %v127
  %132 = vst [vmem:[%s2 + $0x8] sm:$0xff] %v128
  %133 = vst [vmem:[%s2 + $0x10] sm:$0xff] %v129
  %134 = vst [vmem:[%s2 + $0x18] sm:$0xff] %v130
  // Predicated region
  $region10: #{_focal_impl.1} parent=0 // pred_check
    _
  $region11: #{_focal_impl.1} parent=0 // pred_check_branch
    %136 = sbr.rel (0) target = $region13
  $region12: #{_focal_impl.1} parent=0 // pred_region
    _
  $region13: #{_focal_impl.1} parent=0 // pred_fallthru
    _
  // Predicated region
  $region14: #{_focal_impl.1} parent=0 // pred_check
    _
  $region15: #{_focal_impl.1} parent=0 // pred_check_branch
    %138 = sbr.rel (0) target = $region17
  $region16: #{_focal_impl.1} parent=0 // pred_region
    _
  $region17: #{_focal_impl.1} parent=0 // pred_fallthru
    _

</llo_original>
